<compile_context>
chip_gen: v7x
topology: tpu7x:2x2x1
jax: 0.10.0
libtpu: 0.0.40
codegen_flags: <defaults>
</compile_context>

<pallas_src>
import math
import functools

import jax
import jax.numpy as jnp
from jax import lax
from jax.experimental import pallas as pl
from jax.experimental.pallas import tpu as pltpu

# ----- "config" ---------------------------------------------------------------
EMB = 32          # config.emb_size
HID = 32          # config.hid_size
SEQ = 8           # sequence length of the example input
BATCH = 2
NUM_BLOCK = 2     # config.num_block (fc_3 init scale)
EPS = 1e-5
CONFIG = {"PreNorm": "approx", "PostNorm": "yes"}
# config.enable_relation_network_bias_{1,2,3} = False (biases would be zero anyway)


def _ln(x):
    """normalize(): LayerNorm over the last axis, no learnable affine. f32 math."""
    mu = jnp.mean(x, axis=-1, keepdims=True)
    var = jnp.mean(jnp.square(x - mu), axis=-1, keepdims=True)
    return (x - mu) * lax.rsqrt(var + EPS)


def _device_kind():
    try:
        return jax.devices()[0].device_kind.lower()
    except Exception:  # pragma: no cover
        return ""


def _matmul_dtype():
    kind = _device_kind()
    if "v6" in kind or "v7" in kind:
        return jnp.bfloat16      # bf16 MXU path on v6e / v7x
    return jnp.float32           # v5e / unknown: keep f32 (no bf16 VPU for casts)


def _default_batch_chunks(batch):
    kind = _device_kind()
    if "v7" in kind and batch % 2 == 0:
        return 2                 # feed both v7x TensorCores
    return 1                     # single grid step elsewhere


def causal_avg_mask(t, dtype=jnp.float32):
    """M[t,s] = (s <= t) / (t + 1): fused causal mask + window-length averaging."""
    row = jnp.arange(t)[:, None]
    col = jnp.arange(t)[None, :]
    return (col <= row).astype(dtype) / (row + 1).astype(dtype)


# ----- Pallas kernel ------------------------------------------------------------
def block_r_kernel(x_ref, w1_ref, w2_ref, w3_ref, m_ref, o_ref, *,
                   nb, t, mm_dtype, prenorm, postnorm):
    # x_ref block: (nb*t, E) rows; weights full (E,H), (E,H), (H,E); mask (t,t).
    x = x_ref[...].astype(jnp.float32)                                    # (nb*t, E)

    # r = normalize(x)
    r = _ln(x)

    w1 = w1_ref[...].astype(mm_dtype)
    w2 = w2_ref[...].astype(mm_dtype)
    w3 = w3_ref[...].astype(mm_dtype)
    r_mm = r.astype(mm_dtype)

    # a = fc_1(r), b = fc_2(r) on the whole (nb*t, E) slab.
    a = jnp.dot(r_mm, w1, preferred_element_type=jnp.float32)             # (nb*t, H)
    b = jnp.dot(r_mm, w2, preferred_element_type=jnp.float32)             # (nb*t, H)

    if prenorm in ("approx", "exact"):
        # TODO(synk): bar_quadratic_causal_preact ('exact') definition not in the
        # provided snippet; falling back to the 'approx' pre-normalization.
        a = _ln(a)
        b = _ln(b)
    elif prenorm == "no":
        pass
    else:
        raise ValueError(prenorm)

    h = a.shape[-1]
    # Leading-dim split only: rows group in whole (8, lane) tiles (t == 8), so
    # these reshapes are layout-preserving.
    a3 = a.reshape(nb, t, h).astype(mm_dtype)                             # (nb, t, H)
    b3 = b.reshape(nb, t, h).astype(mm_dtype)                             # cast once, reused twice

    # bar_quadratic_causal(a, b): batched, transposed-RHS handled inside the MXU.
    s = lax.dot_general(a3, b3,
                        (((2,), (2,)), ((0,), (0,))),
                        preferred_element_type=jnp.float32)               # (nb, t, t)
    s = s * m_ref[...][None, :, :]                                        # fused mask + 1/(t+1)
    rq = lax.dot_general(s.astype(mm_dtype), b3,
                         (((2,), (1,)), ((0,), (0,))),
                         preferred_element_type=jnp.float32)              # (nb, t, H)
    rq = rq.reshape(nb * t, h)

    if postnorm == "yes":
        rq = _ln(rq)
    elif postnorm == "no":
        pass
    else:
        raise ValueError(postnorm)

    # r = fc_3(r); x = x + r   -> one contiguous (nb*t, E) store.
    out = jnp.dot(rq.astype(mm_dtype), w3, preferred_element_type=jnp.float32)
    o_ref[...] = (x + out).astype(o_ref.dtype)


def block_r_ablation(x, w1t, w2t, w3t, *, batch_chunks=None, mm_dtype=None):
    B, T, E = x.shape
    H = w1t.shape[1]
    if batch_chunks is None:
        batch_chunks = _default_batch_chunks(B)
    if mm_dtype is None:
        mm_dtype = _matmul_dtype()
    assert B % batch_chunks == 0
    nb = B // batch_chunks          # batches per grid step
    rows = nb * T

    mask = causal_avg_mask(T)
    x2 = x.reshape(B * T, E)        # contiguous, token-major rows (free reshape)

    kernel = functools.partial(
        block_r_kernel, nb=nb, t=T, mm_dtype=mm_dtype,
        prenorm=CONFIG["PreNorm"], postnorm=CONFIG["PostNorm"],
    )
    out2 = pl.pallas_call(
        kernel,
        out_shape=jax.ShapeDtypeStruct((B * T, E), x.dtype),
        grid_spec=pltpu.PrefetchScalarGridSpec(
            num_scalar_prefetch=0,
            grid=(batch_chunks,),
            in_specs=[
                pl.BlockSpec((rows, E), lambda i: (i, 0)),   # activations (chunk of rows)
                pl.BlockSpec((E, H), lambda i: (0, 0)),      # fc_1.weight^T (resident)
                pl.BlockSpec((E, H), lambda i: (0, 0)),      # fc_2.weight^T (resident)
                pl.BlockSpec((H, E), lambda i: (0, 0)),      # fc_3.weight^T (resident)
                pl.BlockSpec((T, T), lambda i: (0, 0)),      # fused causal/avg mask
            ],
            out_specs=pl.BlockSpec((rows, E), lambda i: (i, 0)),
        ),
        compiler_params=pltpu.CompilerParams(dimension_semantics=("parallel",)),
    )(x2, w1t, w2t, w3t, mask)
    return out2.reshape(B, T, E)


# ----- Pure-JAX reference (for correctness check) -------------------------------
def block_r_reference(x, w1t, w2t, w3t):
    r = _ln(x)
    a = jnp.einsum("bte,eh->bth", r, w1t)
    b = jnp.einsum("bte,eh->bth", r, w2t)
    if CONFIG["PreNorm"] in ("approx", "exact"):
        a = _ln(a)
        b = _ln(b)
    T = x.shape[1]
    s = jnp.einsum("bth,bsh->bts", a, b)
    mask = jnp.tril(jnp.ones((T, T), dtype=bool))
    s = jnp.where(mask[None], s, 0.0)
    s = s / jnp.arange(1, T + 1, dtype=jnp.float32)[None, :, None]
    rq = jnp.einsum("bts,bsh->bth", s, b)
    if CONFIG["PostNorm"] == "yes":
        rq = _ln(rq)
    out = jnp.einsum("bth,he->bte", rq, w3t)
    return x + out


if __name__ == "__main__":
    key = jax.random.PRNGKey(0)
    kx, k1, k2, k3 = jax.random.split(key, 4)

    # Deterministic parameter init mirroring initialize_parameters():
    #   fc_1.weight, fc_2.weight ~ N(0, 0.02^2)                   shape (HID, EMB)
    #   fc_3.weight              ~ N(0, (0.02/sqrt(num_block))^2) shape (EMB, HID)
    w1 = 0.02 * jax.random.normal(k1, (HID, EMB), jnp.float32)
    w2 = 0.02 * jax.random.normal(k2, (HID, EMB), jnp.float32)
    w3 = (0.02 / math.sqrt(NUM_BLOCK)) * jax.random.normal(k3, (EMB, HID), jnp.float32)

    # Pre-transpose to (in, out) for the kernel.
    w1t = w1.T  # (EMB, HID)
    w2t = w2.T  # (EMB, HID)
    w3t = w3.T  # (HID, EMB)

    x = jax.random.normal(kx, (BATCH, SEQ, EMB), jnp.float32)

    out = block_r_ablation(x, w1t, w2t, w3t)
    out = jax.block_until_ready(out)

    ref = block_r_reference(x, w1t, w2t, w3t)
    assert out.shape == x.shape and out.dtype == x.dtype
    assert jnp.allclose(out, ref, rtol=1e-2, atol=1e-2), "kernel mismatch vs reference"

    print("KERNEL_OK")
</pallas_src>

<mosaic_0001>
module attributes {stable_mosaic.version = 11 : i64} {
  func.func @block_r_kernel(%arg0: i32, %arg1: memref<16x32xf32, #tpu.memory_space<vmem>>, %arg2: memref<32x32xf32, #tpu.memory_space<vmem>>, %arg3: memref<32x32xf32, #tpu.memory_space<vmem>>, %arg4: memref<32x32xf32, #tpu.memory_space<vmem>>, %arg5: memref<8x8xf32, #tpu.memory_space<vmem>>, %arg6: memref<16x32xf32, #tpu.memory_space<vmem>>) attributes {dimension_semantics = [#tpu.dimension_semantics<parallel>], iteration_bounds = array<i64: 1>, scalar_prefetch = 0 : i64, scratch_operands = 0 : i64, tpu.core_type = #tpu.core_type<tc>, window_params = [{transform_indices = @transform_0, window_bounds = array<i64: 16, 32>}, {pipeline_mode = #tpu.pipeline_mode<synchronous>, transform_indices = @transform_1, window_bounds = array<i64: 32, 32>}, {pipeline_mode = #tpu.pipeline_mode<synchronous>, transform_indices = @transform_2, window_bounds = array<i64: 32, 32>}, {pipeline_mode = #tpu.pipeline_mode<synchronous>, transform_indices = @transform_3, window_bounds = array<i64: 32, 32>}, {pipeline_mode = #tpu.pipeline_mode<synchronous>, transform_indices = @transform_4, window_bounds = array<i64: 8, 8>}, {transform_indices = @transform_5, window_bounds = array<i64: 16, 32>}]} {
    %c0 = arith.constant 0 : index
    %c0_0 = arith.constant 0 : index
    %0 = vector.load %arg1[%c0, %c0_0] : memref<16x32xf32, #tpu.memory_space<vmem>>, vector<16x32xf32>
    %cst = arith.constant dense<0.000000e+00> : vector<16xf32>
    %1 = vector.multi_reduction <add>, %0, %cst [1] : vector<16x32xf32> to vector<16xf32>
    %2 = vector.shape_cast %1 : vector<16xf32> to vector<16x1xf32>
    %cst_1 = arith.constant 3.200000e+01 : f32
    %3 = vector.broadcast %cst_1 : f32 to vector<16x1xf32>
    %4 = arith.divf %2, %3 : vector<16x1xf32>
    %5 = vector.broadcast %4 : vector<16x1xf32> to vector<16x32xf32>
    %6 = arith.subf %0, %5 : vector<16x32xf32>
    %7 = arith.mulf %6, %6 : vector<16x32xf32>
    %cst_2 = arith.constant dense<0.000000e+00> : vector<16xf32>
    %8 = vector.multi_reduction <add>, %7, %cst_2 [1] : vector<16x32xf32> to vector<16xf32>
    %9 = vector.shape_cast %8 : vector<16xf32> to vector<16x1xf32>
    %cst_3 = arith.constant 3.200000e+01 : f32
    %10 = vector.broadcast %cst_3 : f32 to vector<16x1xf32>
    %11 = arith.divf %9, %10 : vector<16x1xf32>
    %12 = vector.broadcast %4 : vector<16x1xf32> to vector<16x32xf32>
    %13 = arith.subf %0, %12 : vector<16x32xf32>
    %cst_4 = arith.constant 9.99999974E-6 : f32
    %14 = vector.broadcast %cst_4 : f32 to vector<16x1xf32>
    %15 = arith.addf %11, %14 : vector<16x1xf32>
    %16 = math.rsqrt %15 : vector<16x1xf32>
    %17 = vector.broadcast %16 : vector<16x1xf32> to vector<16x32xf32>
    %18 = arith.mulf %13, %17 : vector<16x32xf32>
    %c0_5 = arith.constant 0 : index
    %c0_6 = arith.constant 0 : index
    %19 = vector.load %arg2[%c0_5, %c0_6] : memref<32x32xf32, #tpu.memory_space<vmem>>, vector<32x32xf32>
    %c0_7 = arith.constant 0 : index
    %c0_8 = arith.constant 0 : index
    %20 = vector.load %arg3[%c0_7, %c0_8] : memref<32x32xf32, #tpu.memory_space<vmem>>, vector<32x32xf32>
    %c0_9 = arith.constant 0 : index
    %c0_10 = arith.constant 0 : index
    %21 = vector.load %arg4[%c0_9, %c0_10] : memref<32x32xf32, #tpu.memory_space<vmem>>, vector<32x32xf32>
    %cst_11 = arith.constant dense<0.000000e+00> : vector<16x32xf32>
    %22 = tpu.matmul %18, %19, %cst_11 {dimension_numbers = #tpu.dot_dimension_numbers<[1], [0], [0], [1], [0, 0, 1, 1], [], []>} : vector<16x32xf32>, vector<32x32xf32>, vector<16x32xf32> -> vector<16x32xf32>
    %cst_12 = arith.constant dense<0.000000e+00> : vector<16x32xf32>
    %23 = tpu.matmul %18, %20, %cst_12 {dimension_numbers = #tpu.dot_dimension_numbers<[1], [0], [0], [1], [0, 0, 1, 1], [], []>} : vector<16x32xf32>, vector<32x32xf32>, vector<16x32xf32> -> vector<16x32xf32>
    %cst_13 = arith.constant dense<0.000000e+00> : vector<16xf32>
    %24 = vector.multi_reduction <add>, %22, %cst_13 [1] : vector<16x32xf32> to vector<16xf32>
    %25 = vector.shape_cast %24 : vector<16xf32> to vector<16x1xf32>
    %cst_14 = arith.constant 3.200000e+01 : f32
    %26 = vector.broadcast %cst_14 : f32 to vector<16x1xf32>
    %27 = arith.divf %25, %26 : vector<16x1xf32>
    %28 = vector.broadcast %27 : vector<16x1xf32> to vector<16x32xf32>
    %29 = arith.subf %22, %28 : vector<16x32xf32>
    %30 = arith.mulf %29, %29 : vector<16x32xf32>
    %cst_15 = arith.constant dense<0.000000e+00> : vector<16xf32>
    %31 = vector.multi_reduction <add>, %30, %cst_15 [1] : vector<16x32xf32> to vector<16xf32>
    %32 = vector.shape_cast %31 : vector<16xf32> to vector<16x1xf32>
    %cst_16 = arith.constant 3.200000e+01 : f32
    %33 = vector.broadcast %cst_16 : f32 to vector<16x1xf32>
    %34 = arith.divf %32, %33 : vector<16x1xf32>
    %35 = vector.broadcast %27 : vector<16x1xf32> to vector<16x32xf32>
    %36 = arith.subf %22, %35 : vector<16x32xf32>
    %cst_17 = arith.constant 9.99999974E-6 : f32
    %37 = vector.broadcast %cst_17 : f32 to vector<16x1xf32>
    %38 = arith.addf %34, %37 : vector<16x1xf32>
    %39 = math.rsqrt %38 : vector<16x1xf32>
    %40 = vector.broadcast %39 : vector<16x1xf32> to vector<16x32xf32>
    %41 = arith.mulf %36, %40 : vector<16x32xf32>
    %cst_18 = arith.constant dense<0.000000e+00> : vector<16xf32>
    %42 = vector.multi_reduction <add>, %23, %cst_18 [1] : vector<16x32xf32> to vector<16xf32>
    %43 = vector.shape_cast %42 : vector<16xf32> to vector<16x1xf32>
    %cst_19 = arith.constant 3.200000e+01 : f32
    %44 = vector.broadcast %cst_19 : f32 to vector<16x1xf32>
    %45 = arith.divf %43, %44 : vector<16x1xf32>
    %46 = vector.broadcast %45 : vector<16x1xf32> to vector<16x32xf32>
    %47 = arith.subf %23, %46 : vector<16x32xf32>
    %48 = arith.mulf %47, %47 : vector<16x32xf32>
    %cst_20 = arith.constant dense<0.000000e+00> : vector<16xf32>
    %49 = vector.multi_reduction <add>, %48, %cst_20 [1] : vector<16x32xf32> to vector<16xf32>
    %50 = vector.shape_cast %49 : vector<16xf32> to vector<16x1xf32>
    %cst_21 = arith.constant 3.200000e+01 : f32
    %51 = vector.broadcast %cst_21 : f32 to vector<16x1xf32>
    %52 = arith.divf %50, %51 : vector<16x1xf32>
    %53 = vector.broadcast %45 : vector<16x1xf32> to vector<16x32xf32>
    %54 = arith.subf %23, %53 : vector<16x32xf32>
    %cst_22 = arith.constant 9.99999974E-6 : f32
    %55 = vector.broadcast %cst_22 : f32 to vector<16x1xf32>
    %56 = arith.addf %52, %55 : vector<16x1xf32>
    %57 = math.rsqrt %56 : vector<16x1xf32>
    %58 = vector.broadcast %57 : vector<16x1xf32> to vector<16x32xf32>
    %59 = arith.mulf %54, %58 : vector<16x32xf32>
    %60 = vector.shape_cast %41 : vector<16x32xf32> to vector<2x8x32xf32>
    %61 = vector.shape_cast %59 : vector<16x32xf32> to vector<2x8x32xf32>
    %cst_23 = arith.constant dense<0.000000e+00> : vector<2x8x8xf32>
    %62 = tpu.matmul %60, %61, %cst_23 {dimension_numbers = #tpu.dot_dimension_numbers<[2], [2], [1], [1], [0, 0, 0, 1, 1, 1], [0], [0]>} : vector<2x8x32xf32>, vector<2x8x32xf32>, vector<2x8x8xf32> -> vector<2x8x8xf32>
    %c0_24 = arith.constant 0 : index
    %c0_25 = arith.constant 0 : index
    %63 = vector.load %arg5[%c0_24, %c0_25] : memref<8x8xf32, #tpu.memory_space<vmem>>, vector<8x8xf32>
    %64 = vector.shape_cast %63 : vector<8x8xf32> to vector<1x8x8xf32>
    %65 = vector.broadcast %64 : vector<1x8x8xf32> to vector<2x8x8xf32>
    %66 = arith.mulf %62, %65 : vector<2x8x8xf32>
    %cst_26 = arith.constant dense<0.000000e+00> : vector<2x8x32xf32>
    %67 = tpu.matmul %66, %61, %cst_26 {dimension_numbers = #tpu.dot_dimension_numbers<[2], [1], [1], [2], [0, 0, 0, 1, 1, 2], [0], [0]>} : vector<2x8x8xf32>, vector<2x8x32xf32>, vector<2x8x32xf32> -> vector<2x8x32xf32>
    %68 = vector.shape_cast %67 : vector<2x8x32xf32> to vector<16x32xf32>
    %cst_27 = arith.constant dense<0.000000e+00> : vector<16xf32>
    %69 = vector.multi_reduction <add>, %68, %cst_27 [1] : vector<16x32xf32> to vector<16xf32>
    %70 = vector.shape_cast %69 : vector<16xf32> to vector<16x1xf32>
    %cst_28 = arith.constant 3.200000e+01 : f32
    %71 = vector.broadcast %cst_28 : f32 to vector<16x1xf32>
    %72 = arith.divf %70, %71 : vector<16x1xf32>
    %73 = vector.broadcast %72 : vector<16x1xf32> to vector<16x32xf32>
    %74 = arith.subf %68, %73 : vector<16x32xf32>
    %75 = arith.mulf %74, %74 : vector<16x32xf32>
    %cst_29 = arith.constant dense<0.000000e+00> : vector<16xf32>
    %76 = vector.multi_reduction <add>, %75, %cst_29 [1] : vector<16x32xf32> to vector<16xf32>
    %77 = vector.shape_cast %76 : vector<16xf32> to vector<16x1xf32>
    %cst_30 = arith.constant 3.200000e+01 : f32
    %78 = vector.broadcast %cst_30 : f32 to vector<16x1xf32>
    %79 = arith.divf %77, %78 : vector<16x1xf32>
    %80 = vector.broadcast %72 : vector<16x1xf32> to vector<16x32xf32>
    %81 = arith.subf %68, %80 : vector<16x32xf32>
    %cst_31 = arith.constant 9.99999974E-6 : f32
    %82 = vector.broadcast %cst_31 : f32 to vector<16x1xf32>
    %83 = arith.addf %79, %82 : vector<16x1xf32>
    %84 = math.rsqrt %83 : vector<16x1xf32>
    %85 = vector.broadcast %84 : vector<16x1xf32> to vector<16x32xf32>
    %86 = arith.mulf %81, %85 : vector<16x32xf32>
    %cst_32 = arith.constant dense<0.000000e+00> : vector<16x32xf32>
    %87 = tpu.matmul %86, %21, %cst_32 {dimension_numbers = #tpu.dot_dimension_numbers<[1], [0], [0], [1], [0, 0, 1, 1], [], []>} : vector<16x32xf32>, vector<32x32xf32>, vector<16x32xf32> -> vector<16x32xf32>
    %88 = arith.addf %0, %87 : vector<16x32xf32>
    %c0_33 = arith.constant 0 : index
    %c0_34 = arith.constant 0 : index
    %89 = vector.load %arg6[%c0_33, %c0_34] : memref<16x32xf32, #tpu.memory_space<vmem>>, vector<16x32xf32>
    tpu.vector_store %arg6[%c0_33, %c0_34], %88 {strides = array<i32>} : memref<16x32xf32, #tpu.memory_space<vmem>>, vector<16x32xf32>,
    return
  }
  func.func @transform_0(%arg0: i32) -> (i32, i32) {
    %c0_i32 = arith.constant 0 : i32
    %c0_i32_0 = arith.constant 0 : i32
    return %arg0, %c0_i32 : i32, i32
  }
  func.func @transform_1(%arg0: i32) -> (i32, i32) {
    %c0_i32 = arith.constant 0 : i32
    %c0_i32_0 = arith.constant 0 : i32
    %c0_i32_1 = arith.constant 0 : i32
    return %c0_i32, %c0_i32_0 : i32, i32
  }
  func.func @transform_2(%arg0: i32) -> (i32, i32) {
    %c0_i32 = arith.constant 0 : i32
    %c0_i32_0 = arith.constant 0 : i32
    %c0_i32_1 = arith.constant 0 : i32
    return %c0_i32, %c0_i32_0 : i32, i32
  }
  func.func @transform_3(%arg0: i32) -> (i32, i32) {
    %c0_i32 = arith.constant 0 : i32
    %c0_i32_0 = arith.constant 0 : i32
    %c0_i32_1 = arith.constant 0 : i32
    return %c0_i32, %c0_i32_0 : i32, i32
  }
  func.func @transform_4(%arg0: i32) -> (i32, i32) {
    %c0_i32 = arith.constant 0 : i32
    %c0_i32_0 = arith.constant 0 : i32
    %c0_i32_1 = arith.constant 0 : i32
    return %c0_i32, %c0_i32_0 : i32, i32
  }
  func.func @transform_5(%arg0: i32) -> (i32, i32) {
    %c0_i32 = arith.constant 0 : i32
    %c0_i32_0 = arith.constant 0 : i32
    return %arg0, %c0_i32 : i32, i32
  }
}

</mosaic_0001>

<llo_original>
// kernel: tpu_custom_call.1
$region0: #{tpu_custom_call.1}
  #allocation0 [shape = 'u32[]', space=smem, size = 0x4, offset = 0x4, fixed_abs, tag = 'smem constant byte address 0x4 - core index']
  #allocation1 [shape = 'u32[144,128]{1,0:T(1,128)}', space=vmem, size = 0x12000, scoped, tag = 'internal scratch']
  %s0 = inlined_call_operand.hbm [shape: f32[16,32], index: 0, kind: input, shape index: {}]
  %s1 = inlined_call_operand.hbm [shape: f32[32,32], index: 1, kind: input, shape index: {}]
  %s2 = inlined_call_operand.hbm [shape: f32[32,32], index: 2, kind: input, shape index: {}]
  %s3 = inlined_call_operand.hbm [shape: f32[32,32], index: 3, kind: input, shape index: {}]
  %s4 = inlined_call_operand.vmem [shape: f32[8,8], index: 4, kind: input, shape index: {}]
  %s5 = inlined_call_operand.hbm [shape: f32[16,32], index: 5, kind: output, shape index: {}]
  %s6 = sld [smem:[#allocation0]]
  $region46: #{tpu_custom_call.1} parent=0
    _
  %s8 = ssub.s32 1, %s6
  %s9 = scalar_select 0, %s8, %s6
  $region1: #{tpu_custom_call.1} parent=0
    #allocation2 [shape = 'u8[8192]{0}', space=vmem, size = 0x2000, scoped, tag = 'input window, operand 0, single buffered']
    #allocation3 [shape = 's32[1]{0}', space=sflag, size = 0x4, scoped, tag = 'scoped memory for tpu_custom_call.1']
    #allocation4 [shape = 's32[1]{0}', space=sflag, size = 0x4, scoped, tag = 'scoped memory for tpu_custom_call.1']
    #allocation5 [shape = 'u8[16384]{0}', space=vmem, size = 0x4000, scoped, tag = 'input window, operand 1, single buffered']
    #allocation6 [shape = 's32[1]{0}', space=sflag, size = 0x4, scoped, tag = 'scoped memory for tpu_custom_call.1']
    #allocation7 [shape = 'u8[16384]{0}', space=vmem, size = 0x4000, scoped, tag = 'input window, operand 2, single buffered']
    #allocation8 [shape = 'u8[16384]{0}', space=vmem, size = 0x4000, scoped, tag = 'input window, operand 3, single buffered']
    #allocation9 [shape = 's32[1]{0}', space=sflag, size = 0x4, scoped, tag = 'scoped memory for tpu_custom_call.1']
    #allocation10 [shape = 'u8[8192]{0}', space=vmem, size = 0x2000, scoped, tag = 'output window, operand 0, single buffered']
    %10 = vsyncpa [#allocation3], 0
    %11 = vsyncpa [#allocation6], 0
    %12 = vsyncpa [#allocation9], 0
    %13 = vsyncpa [#allocation4], 0
    // Predicated region
    $region2: #{tpu_custom_call.1} parent=1 // pred_check
      _
    $region3: #{tpu_custom_call.1} parent=1 // pred_check_branch
      %15 = sbr.rel (0) target = $region5
    $region4: #{tpu_custom_call.1} parent=1 // pred_region
      %s17 = ssub.s32 256, 256
      %18 = vsyncadd [#allocation3], %s17
      %s19 = sshll.u32 [#allocation2], 4
      %s20 = int_to_ptr.vmem [resolvable:$true] %s19
      %25 = dma.hbm_to_vmem [thread:$0]  %s0, 256, %s20, [#allocation3], 128, 128, 8
    $region5: #{tpu_custom_call.1} parent=1 // pred_fallthru
      _
    // Predicated region
    $region6: #{tpu_custom_call.1} parent=1 // pred_check
      _
    $region7: #{tpu_custom_call.1} parent=1 // pred_check_branch
      %27 = sbr.rel (0) target = $region9
    $region8: #{tpu_custom_call.1} parent=1 // pred_region
      %s29 = ssub.s32 512, 512
      %30 = vsyncadd [#allocation6], %s29
      %s31 = sshll.u32 [#allocation5], 4
      %s32 = int_to_ptr.vmem [resolvable:$true] %s31
      %37 = dma.hbm_to_vmem [thread:$0]  %s1, 512, %s32, [#allocation6], 128, 128, 8
    $region9: #{tpu_custom_call.1} parent=1 // pred_fallthru
      _
    // Predicated region
    $region10: #{tpu_custom_call.1} parent=1 // pred_check
      _
    $region11: #{tpu_custom_call.1} parent=1 // pred_check_branch
      %39 = sbr.rel (0) target = $region13
    $region12: #{tpu_custom_call.1} parent=1 // pred_region
      %s41 = ssub.s32 512, 512
      %42 = vsyncadd [#allocation6], %s41
      %s43 = sshll.u32 [#allocation7], 4
      %s44 = int_to_ptr.vmem [resolvable:$true] %s43
      %49 = dma.hbm_to_vmem [thread:$0]  %s2, 512, %s44, [#allocation6], 128, 128, 8
    $region13: #{tpu_custom_call.1} parent=1 // pred_fallthru
      _
    // Predicated region
    $region14: #{tpu_custom_call.1} parent=1 // pred_check
      _
    $region15: #{tpu_custom_call.1} parent=1 // pred_check_branch
      %51 = sbr.rel (0) target = $region17
    $region16: #{tpu_custom_call.1} parent=1 // pred_region
      %s53 = ssub.s32 512, 512
      %54 = vsyncadd [#allocation9], %s53
      %s55 = sshll.u32 [#allocation8], 4
      %s56 = int_to_ptr.vmem [resolvable:$true] %s55
      %61 = dma.hbm_to_vmem [thread:$0]  %s3, 512, %s56, [#allocation9], 128, 128, 8
    $region17: #{tpu_custom_call.1} parent=1 // pred_fallthru
      _
    // Predicated region
    $region18: #{tpu_custom_call.1} parent=1 // pred_check
      _
    $region19: #{tpu_custom_call.1} parent=1 // pred_check_branch
      %63 = sbr.rel (0) target = $region21
    $region20: #{tpu_custom_call.1} parent=1 // pred_region
      _
    $region21: #{tpu_custom_call.1} parent=1 // pred_fallthru
      _
    // Predicated region
    $region22: #{tpu_custom_call.1} parent=1 // pred_check
      _
    $region23: #{tpu_custom_call.1} parent=1 // pred_check_branch
      %65 = sbr.rel (0) target = $region25
    $region24: #{tpu_custom_call.1} parent=1 // pred_region
      %66 = dma.done [#allocation3], 256
    $region25: #{tpu_custom_call.1} parent=1 // pred_fallthru
      _
    // Predicated region
    $region26: #{tpu_custom_call.1} parent=1 // pred_check
      _
    $region27: #{tpu_custom_call.1} parent=1 // pred_check_branch
      %68 = sbr.rel (0) target = $region29
    $region28: #{tpu_custom_call.1} parent=1 // pred_region
      %69 = dma.done [#allocation6], 512
    $region29: #{tpu_custom_call.1} parent=1 // pred_fallthru
      _
    // Predicated region
    $region30: #{tpu_custom_call.1} parent=1 // pred_check
      _
    $region31: #{tpu_custom_call.1} parent=1 // pred_check_branch
      %71 = sbr.rel (0) target = $region33
    $region32: #{tpu_custom_call.1} parent=1 // pred_region
      %72 = dma.done [#allocation6], 512
    $region33: #{tpu_custom_call.1} parent=1 // pred_fallthru
      _
    // Predicated region
    $region34: #{tpu_custom_call.1} parent=1 // pred_check
      _
    $region35: #{tpu_custom_call.1} parent=1 // pred_check_branch
      %74 = sbr.rel (0) target = $region37
    $region36: #{tpu_custom_call.1} parent=1 // pred_region
      %75 = dma.done [#allocation9], 512
    $region37: #{tpu_custom_call.1} parent=1 // pred_fallthru
      _
    %v76 = vld [vmem:[#allocation2] sm:$0xff]
    %v77 = vld [vmem:[#allocation2 + $0x8] sm:$0xff]
    %vm78 = vcmask 261120
    %v79 = vsel %vm78, %v76, 0.0
    %80 = vadd.xlane.f32.xlu0 %v79
    %v81 = vpop.xlane.xlu0 %80
    %v82 = vsel %vm78, %v77, 0.0
    %83 = vadd.xlane.f32.xlu0 %v82
    %v84 = vpop.xlane.xlu0 %83
    %v85 = vrcp.pop 32.0
    %v86 = vmul.f32 %v81, %v85
    %v87 = vmul.f32 %v84, %v85
    %v88 = vsub.f32 %v76, %v86
    %v89 = vsub.f32 %v77, %v87
    %v90 = vmul.f32 %v88, %v88
    %v91 = vmul.f32 %v89, %v89
    %v92 = vsel %vm78, %v90, 0.0
    %93 = vadd.xlane.f32.xlu0 %v92
    %v94 = vpop.xlane.xlu0 %93
    %v95 = vsel %vm78, %v91, 0.0
    %96 = vadd.xlane.f32.xlu0 %v95
    %v97 = vpop.xlane.xlu0 %96
    %v98 = vmul.f32 %v94, %v85
    %v99 = vmul.f32 %v97, %v85
    %v100 = vadd.f32 %v98, 1e-05
    %v101 = vadd.f32 %v99, 1e-05
    %v102 = vrsqrt.pop %v100
    %v103 = vrsqrt.pop %v101
    %v104 = vmul.f32 %v88, %v102
    %v105 = vmul.f32 %v89, %v103
    %v106 = vld [vmem:[#allocation5] sm:$0xff]
    %v107 = vld [vmem:[#allocation5 + $0x8] sm:$0xff]
    %v108 = vld [vmem:[#allocation5 + $0x10] sm:$0xff]
    %v109 = vld [vmem:[#allocation5 + $0x18] sm:$0xff]
    %v110 = vld [vmem:[#allocation7] sm:$0xff]
    %v111 = vld [vmem:[#allocation7 + $0x8] sm:$0xff]
    %v112 = vld [vmem:[#allocation7 + $0x10] sm:$0xff]
    %v113 = vld [vmem:[#allocation7 + $0x18] sm:$0xff]
    %v114 = vld [vmem:[#allocation8] sm:$0xff]
    %v115 = vld [vmem:[#allocation8 + $0x8] sm:$0xff]
    %v116 = vld [vmem:[#allocation8 + $0x10] sm:$0xff]
    %v117 = vld [vmem:[#allocation8 + $0x18] sm:$0xff]
    %v119 = vsel %vm78, %v104, 0
    %v122 = vsel %vm78, %v105, 0
    %124 = vmatprep.subr.mxu0 0.0
    %125 = vmatpush1.msra.mxu0 %v106
    %126 = vmatprep.subr.mxu0 0.0
    %127 = vmatpush1.msra.mxu0 %v107
    %128 = vmatprep.subr.mxu0 0.0
    %129 = vmatpush1.msra.mxu0 %v108
    %130 = vmatprep.subr.mxu0 0.0
    %131 = vmatpush1.msra.mxu0 %v109
    %132 = vmatprep.subr.mxu0 0.0
    %133 = vmatpush1.msra.mxu0 0.0
    %134 = vmatprep.subr.mxu0 0.0
    %135 = vmatpush1.msra.mxu0 0.0
    %136 = vmatprep.subr.mxu0 0.0
    %137 = vmatpush1.msra.mxu0 0.0
    %138 = vmatprep.subr.mxu0 0.0
    %139 = vmatpush1.msra.mxu0 0.0
    %140 = vmatprep.subr.mxu0 0.0
    %141 = vmatpush1.msra.mxu0 0.0
    %142 = vmatprep.subr.mxu0 0.0
    %143 = vmatpush1.msra.mxu0 0.0
    %144 = vmatprep.subr.mxu0 0.0
    %145 = vmatpush1.msra.mxu0 0.0
    %146 = vmatprep.subr.mxu0 0.0
    %147 = vmatpush1.msra.mxu0 0.0
    %148 = vmatprep.subr.mxu0 0.0
    %149 = vmatpush1.msra.mxu0 0.0
    %150 = vmatprep.subr.mxu0 0.0
    %151 = vmatpush1.msra.mxu0 0.0
    %152 = vmatprep.subr.mxu0 0.0
    %153 = vmatpush1.msra.mxu0 0.0
    %154 = vmatprep.subr.mxu0 0.0
    %155 = vmatpush1.msra.mxu0 0.0
    %156 = vmatprep.subr.mxu0 0.0
    %157 = vmatpush1.msra.mxu0 0.0
    %158 = vmatprep.subr.mxu0 0.0
    %159 = vmatpush1.msra.mxu0 0.0
    %160 = vmatprep.subr.mxu0 0.0
    %161 = vmatpush1.msra.mxu0 0.0
    %162 = vmatprep.subr.mxu0 0.0
    %163 = vmatpush1.msra.mxu0 0.0
    %164 = vmatprep.subr.mxu0 0.0
    %165 = vmatpush1.msra.mxu0 0.0
    %166 = vmatprep.subr.mxu0 0.0
    %167 = vmatpush1.msra.mxu0 0.0
    %168 = vmatprep.subr.mxu0 0.0
    %169 = vmatpush1.msra.mxu0 0.0
    %170 = vmatprep.subr.mxu0 0.0
    %171 = vmatpush1.msra.mxu0 0.0
    %172 = vmatprep.subr.mxu0 0.0
    %173 = vmatpush1.msra.mxu0 0.0
    %174 = vmatprep.subr.mxu0 0.0
    %175 = vmatpush1.msra.mxu0 0.0
    %176 = vmatprep.subr.mxu0 0.0
    %177 = vmatpush1.msra.mxu0 0.0
    %178 = vmatprep.subr.mxu0 0.0
    %179 = vmatpush1.msra.mxu0 0.0
    %180 = vmatprep.subr.mxu0 0.0
    %181 = vmatpush1.msra.mxu0 0.0
    %182 = vmatprep.subr.mxu0 0.0
    %183 = vmatpush1.msra.mxu0 0.0
    %184 = vmatprep.subr.mxu0 0.0
    %185 = vmatpush1.msra.mxu0 0.0
    %186 = vmatprep.subr.mxu0 0.0
    %187 = vmatpush1.msra.mxu0 0.0
    %188 = vmatprep.mubr.f32.mxu0 0.0
    %189 = vmatmul.mubr.f32.gmra.mrb[0].mxu0 %v119
    %v190 = vpop.f32.mrb[0].mxu0
    %v191 = vadd.f32 0.0, %v190
    %v192 = vpop.f32.mrb[0].mxu0
    %193 = vmatprep.mubr.f32.mxu0 0.0
    %194 = vmatmul.mubr.f32.gmra.mrb[0].mxu0 %v122
    %v195 = vpop.f32.mrb[0].mxu0
    %v196 = vadd.f32 0.0, %v195
    %v197 = vpop.f32.mrb[0].mxu0
    %198 = vdwg.mxu0
    %199 = vmatprep.subr.mxu0 0.0
    %200 = vmatpush1.msra.mxu0 %v110
    %201 = vmatprep.subr.mxu0 0.0
    %202 = vmatpush1.msra.mxu0 %v111
    %203 = vmatprep.subr.mxu0 0.0
    %204 = vmatpush1.msra.mxu0 %v112
    %205 = vmatprep.subr.mxu0 0.0
    %206 = vmatpush1.msra.mxu0 %v113
    %207 = vmatprep.subr.mxu0 0.0
    %208 = vmatpush1.msra.mxu0 0.0
    %209 = vmatprep.subr.mxu0 0.0
    %210 = vmatpush1.msra.mxu0 0.0
    %211 = vmatprep.subr.mxu0 0.0
    %212 = vmatpush1.msra.mxu0 0.0
    %213 = vmatprep.subr.mxu0 0.0
    %214 = vmatpush1.msra.mxu0 0.0
    %215 = vmatprep.subr.mxu0 0.0
    %216 = vmatpush1.msra.mxu0 0.0
    %217 = vmatprep.subr.mxu0 0.0
    %218 = vmatpush1.msra.mxu0 0.0
    %219 = vmatprep.subr.mxu0 0.0
    %220 = vmatpush1.msra.mxu0 0.0
    %221 = vmatprep.subr.mxu0 0.0
    %222 = vmatpush1.msra.mxu0 0.0
    %223 = vmatprep.subr.mxu0 0.0
    %224 = vmatpush1.msra.mxu0 0.0
    %225 = vmatprep.subr.mxu0 0.0
    %226 = vmatpush1.msra.mxu0 0.0
    %227 = vmatprep.subr.mxu0 0.0
    %228 = vmatpush1.msra.mxu0 0.0
    %229 = vmatprep.subr.mxu0 0.0
    %230 = vmatpush1.msra.mxu0 0.0
    %231 = vmatprep.subr.mxu0 0.0
    %232 = vmatpush1.msra.mxu0 0.0
    %233 = vmatprep.subr.mxu0 0.0
    %234 = vmatpush1.msra.mxu0 0.0
    %235 = vmatprep.subr.mxu0 0.0
    %236 = vmatpush1.msra.mxu0 0.0
    %237 = vmatprep.subr.mxu0 0.0
    %238 = vmatpush1.msra.mxu0 0.0
    %239 = vmatprep.subr.mxu0 0.0
    %240 = vmatpush1.msra.mxu0 0.0
    %241 = vmatprep.subr.mxu0 0.0
    %242 = vmatpush1.msra.mxu0 0.0
    %243 = vmatprep.subr.mxu0 0.0
    %244 = vmatpush1.msra.mxu0 0.0
    %245 = vmatprep.subr.mxu0 0.0
    %246 = vmatpush1.msra.mxu0 0.0
    %247 = vmatprep.subr.mxu0 0.0
    %248 = vmatpush1.msra.mxu0 0.0
    %249 = vmatprep.subr.mxu0 0.0
    %250 = vmatpush1.msra.mxu0 0.0
    %251 = vmatprep.subr.mxu0 0.0
    %252 = vmatpush1.msra.mxu0 0.0
    %253 = vmatprep.subr.mxu0 0.0
    %254 = vmatpush1.msra.mxu0 0.0
    %255 = vmatprep.subr.mxu0 0.0
    %256 = vmatpush1.msra.mxu0 0.0
    %257 = vmatprep.subr.mxu0 0.0
    %258 = vmatpush1.msra.mxu0 0.0
    %259 = vmatprep.subr.mxu0 0.0
    %260 = vmatpush1.msra.mxu0 0.0
    %261 = vmatprep.subr.mxu0 0.0
    %262 = vmatpush1.msra.mxu0 0.0
    %263 = vmatprep.mubr.f32.mxu0 0.0
    %264 = vmatmul.mubr.f32.gmra.mrb[0].mxu0 %v119
    %v265 = vpop.f32.mrb[0].mxu0
    %v266 = vadd.f32 0.0, %v265
    %v267 = vpop.f32.mrb[0].mxu0
    %268 = vmatprep.mubr.f32.mxu0 0.0
    %269 = vmatmul.mubr.f32.gmra.mrb[0].mxu0 %v122
    %v270 = vpop.f32.mrb[0].mxu0
    %v271 = vadd.f32 0.0, %v270
    %v272 = vpop.f32.mrb[0].mxu0
    %273 = vdwg.mxu0
    %v274 = vsel %vm78, %v191, 0.0
    %275 = vadd.xlane.f32.xlu0 %v274
    %v276 = vpop.xlane.xlu0 %275
    %v277 = vsel %vm78, %v196, 0.0
    %278 = vadd.xlane.f32.xlu0 %v277
    %v279 = vpop.xlane.xlu0 %278
    %v280 = vmul.f32 %v276, %v85
    %v281 = vmul.f32 %v279, %v85
    %v282 = vsub.f32 %v191, %v280
    %v283 = vsub.f32 %v196, %v281
    %v284 = vmul.f32 %v282, %v282
    %v285 = vmul.f32 %v283, %v283
    %v286 = vsel %vm78, %v284, 0.0
    %287 = vadd.xlane.f32.xlu0 %v286
    %v288 = vpop.xlane.xlu0 %287
    %v289 = vsel %vm78, %v285, 0.0
    %290 = vadd.xlane.f32.xlu0 %v289
    %v291 = vpop.xlane.xlu0 %290
    %v292 = vmul.f32 %v288, %v85
    %v293 = vmul.f32 %v291, %v85
    %v294 = vadd.f32 %v292, 1e-05
    %v295 = vadd.f32 %v293, 1e-05
    %v296 = vrsqrt.pop %v294
    %v297 = vrsqrt.pop %v295
    %v298 = vmul.f32 %v282, %v296
    %v299 = vmul.f32 %v283, %v297
    %v300 = vsel %vm78, %v266, 0.0
    %301 = vadd.xlane.f32.xlu0 %v300
    %v302 = vpop.xlane.xlu0 %301
    %v303 = vsel %vm78, %v271, 0.0
    %304 = vadd.xlane.f32.xlu0 %v303
    %v305 = vpop.xlane.xlu0 %304
    %v306 = vmul.f32 %v302, %v85
    %v307 = vmul.f32 %v305, %v85
    %v308 = vsub.f32 %v266, %v306
    %v309 = vsub.f32 %v271, %v307
    %v310 = vmul.f32 %v308, %v308
    %v311 = vmul.f32 %v309, %v309
    %v312 = vsel %vm78, %v310, 0.0
    %313 = vadd.xlane.f32.xlu0 %v312
    %v314 = vpop.xlane.xlu0 %313
    %v315 = vsel %vm78, %v311, 0.0
    %316 = vadd.xlane.f32.xlu0 %v315
    %v317 = vpop.xlane.xlu0 %316
    %v318 = vmul.f32 %v314, %v85
    %v319 = vmul.f32 %v317, %v85
    %v320 = vadd.f32 %v318, 1e-05
    %v321 = vadd.f32 %v319, 1e-05
    %v322 = vrsqrt.pop %v320
    %v323 = vrsqrt.pop %v321
    %v324 = vmul.f32 %v308, %v322
    %v325 = vmul.f32 %v309, %v323
    %v327 = vsel %vm78, %v298, 0
    %v330 = vsel %vm78, %v324, 0
    %332 = vmatprep.subr.mxu0 0.0
    %333 = vmatpush1.xpose.msra.mxu0 %v330
    %334 = vmatprep.subr.mxu0 0.0
    %335 = vmatpush1.xpose.msra.mxu0 0.0
    %336 = vmatprep.subr.mxu0 0.0
    %337 = vmatpush1.xpose.msra.mxu0 0.0
    %338 = vmatprep.subr.mxu0 0.0
    %339 = vmatpush1.xpose.msra.mxu0 0.0
    %340 = vmatprep.subr.mxu0 0.0
    %341 = vmatpush1.xpose.msra.mxu0 0.0
    %342 = vmatprep.subr.mxu0 0.0
    %343 = vmatpush1.xpose.msra.mxu0 0.0
    %344 = vmatprep.subr.mxu0 0.0
    %345 = vmatpush1.xpose.msra.mxu0 0.0
    %346 = vmatprep.subr.mxu0 0.0
    %347 = vmatpush1.xpose.msra.mxu0 0.0
    %348 = vmatprep.subr.mxu0 0.0
    %349 = vmatpush1.xpose.msra.mxu0 0.0
    %350 = vmatprep.subr.mxu0 0.0
    %351 = vmatpush1.xpose.msra.mxu0 0.0
    %352 = vmatprep.subr.mxu0 0.0
    %353 = vmatpush1.xpose.msra.mxu0 0.0
    %354 = vmatprep.subr.mxu0 0.0
    %355 = vmatpush1.xpose.msra.mxu0 0.0
    %356 = vmatprep.subr.mxu0 0.0
    %357 = vmatpush1.xpose.msra.mxu0 0.0
    %358 = vmatprep.subr.mxu0 0.0
    %359 = vmatpush1.xpose.msra.mxu0 0.0
    %360 = vmatprep.subr.mxu0 0.0
    %361 = vmatpush1.xpose.msra.mxu0 0.0
    %362 = vmatprep.subr.mxu0 0.0
    %363 = vmatpush1.xpose.msra.mxu0 0.0
    %364 = vmatprep.subr.mxu0 0.0
    %365 = vmatpush1.xpose.msra.mxu0 0.0
    %366 = vmatprep.subr.mxu0 0.0
    %367 = vmatpush1.xpose.msra.mxu0 0.0
    %368 = vmatprep.subr.mxu0 0.0
    %369 = vmatpush1.xpose.msra.mxu0 0.0
    %370 = vmatprep.subr.mxu0 0.0
    %371 = vmatpush1.xpose.msra.mxu0 0.0
    %372 = vmatprep.subr.mxu0 0.0
    %373 = vmatpush1.xpose.msra.mxu0 0.0
    %374 = vmatprep.subr.mxu0 0.0
    %375 = vmatpush1.xpose.msra.mxu0 0.0
    %376 = vmatprep.subr.mxu0 0.0
    %377 = vmatpush1.xpose.msra.mxu0 0.0
    %378 = vmatprep.subr.mxu0 0.0
    %379 = vmatpush1.xpose.msra.mxu0 0.0
    %380 = vmatprep.subr.mxu0 0.0
    %381 = vmatpush1.xpose.msra.mxu0 0.0
    %382 = vmatprep.subr.mxu0 0.0
    %383 = vmatpush1.xpose.msra.mxu0 0.0
    %384 = vmatprep.subr.mxu0 0.0
    %385 = vmatpush1.xpose.msra.mxu0 0.0
    %386 = vmatprep.subr.mxu0 0.0
    %387 = vmatpush1.xpose.msra.mxu0 0.0
    %388 = vmatprep.subr.mxu0 0.0
    %389 = vmatpush1.xpose.msra.mxu0 0.0
    %390 = vmatprep.subr.mxu0 0.0
    %391 = vmatpush1.xpose.msra.mxu0 0.0
    %392 = vmatprep.subr.mxu0 0.0
    %393 = vmatpush1.xpose.msra.mxu0 0.0
    %394 = vmatprep.subr.mxu0 0.0
    %395 = vmatpush1.xpose.msra.mxu0 0.0
    %396 = vmatprep.mubr.f32.mxu0 0.0
    %397 = vmatmul.mubr.f32.gmra.mrb[0].mxu0 %v327
    %v398 = vpop.f32.mrb[0].mxu0
    %v399 = vadd.f32 0.0, %v398
    %v400 = vpop.f32.mrb[0].mxu0
    %401 = vdwg.mxu0
    %v403 = vsel %vm78, %v299, 0
    %v406 = vsel %vm78, %v325, 0
    %408 = vmatprep.subr.mxu0 0.0
    %409 = vmatpush1.xpose.msra.mxu0 %v406
    %410 = vmatprep.subr.mxu0 0.0
    %411 = vmatpush1.xpose.msra.mxu0 0.0
    %412 = vmatprep.subr.mxu0 0.0
    %413 = vmatpush1.xpose.msra.mxu0 0.0
    %414 = vmatprep.subr.mxu0 0.0
    %415 = vmatpush1.xpose.msra.mxu0 0.0
    %416 = vmatprep.subr.mxu0 0.0
    %417 = vmatpush1.xpose.msra.mxu0 0.0
    %418 = vmatprep.subr.mxu0 0.0
    %419 = vmatpush1.xpose.msra.mxu0 0.0
    %420 = vmatprep.subr.mxu0 0.0
    %421 = vmatpush1.xpose.msra.mxu0 0.0
    %422 = vmatprep.subr.mxu0 0.0
    %423 = vmatpush1.xpose.msra.mxu0 0.0
    %424 = vmatprep.subr.mxu0 0.0
    %425 = vmatpush1.xpose.msra.mxu0 0.0
    %426 = vmatprep.subr.mxu0 0.0
    %427 = vmatpush1.xpose.msra.mxu0 0.0
    %428 = vmatprep.subr.mxu0 0.0
    %429 = vmatpush1.xpose.msra.mxu0 0.0
    %430 = vmatprep.subr.mxu0 0.0
    %431 = vmatpush1.xpose.msra.mxu0 0.0
    %432 = vmatprep.subr.mxu0 0.0
    %433 = vmatpush1.xpose.msra.mxu0 0.0
    %434 = vmatprep.subr.mxu0 0.0
    %435 = vmatpush1.xpose.msra.mxu0 0.0
    %436 = vmatprep.subr.mxu0 0.0
    %437 = vmatpush1.xpose.msra.mxu0 0.0
    %438 = vmatprep.subr.mxu0 0.0
    %439 = vmatpush1.xpose.msra.mxu0 0.0
    %440 = vmatprep.subr.mxu0 0.0
    %441 = vmatpush1.xpose.msra.mxu0 0.0
    %442 = vmatprep.subr.mxu0 0.0
    %443 = vmatpush1.xpose.msra.mxu0 0.0
    %444 = vmatprep.subr.mxu0 0.0
    %445 = vmatpush1.xpose.msra.mxu0 0.0
    %446 = vmatprep.subr.mxu0 0.0
    %447 = vmatpush1.xpose.msra.mxu0 0.0
    %448 = vmatprep.subr.mxu0 0.0
    %449 = vmatpush1.xpose.msra.mxu0 0.0
    %450 = vmatprep.subr.mxu0 0.0
    %451 = vmatpush1.xpose.msra.mxu0 0.0
    %452 = vmatprep.subr.mxu0 0.0
    %453 = vmatpush1.xpose.msra.mxu0 0.0
    %454 = vmatprep.subr.mxu0 0.0
    %455 = vmatpush1.xpose.msra.mxu0 0.0
    %456 = vmatprep.subr.mxu0 0.0
    %457 = vmatpush1.xpose.msra.mxu0 0.0
    %458 = vmatprep.subr.mxu0 0.0
    %459 = vmatpush1.xpose.msra.mxu0 0.0
    %460 = vmatprep.subr.mxu0 0.0
    %461 = vmatpush1.xpose.msra.mxu0 0.0
    %462 = vmatprep.subr.mxu0 0.0
    %463 = vmatpush1.xpose.msra.mxu0 0.0
    %464 = vmatprep.subr.mxu0 0.0
    %465 = vmatpush1.xpose.msra.mxu0 0.0
    %466 = vmatprep.subr.mxu0 0.0
    %467 = vmatpush1.xpose.msra.mxu0 0.0
    %468 = vmatprep.subr.mxu0 0.0
    %469 = vmatpush1.xpose.msra.mxu0 0.0
    %470 = vmatprep.subr.mxu0 0.0
    %471 = vmatpush1.xpose.msra.mxu0 0.0
    %472 = vmatprep.mubr.f32.mxu0 0.0
    %473 = vmatmul.mubr.f32.gmra.mrb[0].mxu0 %v403
    %v474 = vpop.f32.mrb[0].mxu0
    %v475 = vadd.f32 0.0, %v474
    %v476 = vpop.f32.mrb[0].mxu0
    %477 = vdwg.mxu0
    %v478 = vld [vmem:[%s4] sm:$0xff]
    %v479 = vmul.f32 %v399, %v478
    %v480 = vmul.f32 %v475, %v478
    %vm481 = vcmask 64512
    %v483 = vsel %vm481, %v479, 0
    %485 = vmatprep.subr.mxu0 0.0
    %486 = vmatpush1.msra.mxu0 %v324
    %487 = vmatprep.subr.mxu0 0.0
    %488 = vmatpush1.msra.mxu0 0.0
    %489 = vmatprep.subr.mxu0 0.0
    %490 = vmatpush1.msra.mxu0 0.0
    %491 = vmatprep.subr.mxu0 0.0
    %492 = vmatpush1.msra.mxu0 0.0
    %493 = vmatprep.subr.mxu0 0.0
    %494 = vmatpush1.msra.mxu0 0.0
    %495 = vmatprep.subr.mxu0 0.0
    %496 = vmatpush1.msra.mxu0 0.0
    %497 = vmatprep.subr.mxu0 0.0
    %498 = vmatpush1.msra.mxu0 0.0
    %499 = vmatprep.subr.mxu0 0.0
    %500 = vmatpush1.msra.mxu0 0.0
    %501 = vmatprep.subr.mxu0 0.0
    %502 = vmatpush1.msra.mxu0 0.0
    %503 = vmatprep.subr.mxu0 0.0
    %504 = vmatpush1.msra.mxu0 0.0
    %505 = vmatprep.subr.mxu0 0.0
    %506 = vmatpush1.msra.mxu0 0.0
    %507 = vmatprep.subr.mxu0 0.0
    %508 = vmatpush1.msra.mxu0 0.0
    %509 = vmatprep.subr.mxu0 0.0
    %510 = vmatpush1.msra.mxu0 0.0
    %511 = vmatprep.subr.mxu0 0.0
    %512 = vmatpush1.msra.mxu0 0.0
    %513 = vmatprep.subr.mxu0 0.0
    %514 = vmatpush1.msra.mxu0 0.0
    %515 = vmatprep.subr.mxu0 0.0
    %516 = vmatpush1.msra.mxu0 0.0
    %517 = vmatprep.subr.mxu0 0.0
    %518 = vmatpush1.msra.mxu0 0.0
    %519 = vmatprep.subr.mxu0 0.0
    %520 = vmatpush1.msra.mxu0 0.0
    %521 = vmatprep.subr.mxu0 0.0
    %522 = vmatpush1.msra.mxu0 0.0
    %523 = vmatprep.subr.mxu0 0.0
    %524 = vmatpush1.msra.mxu0 0.0
    %525 = vmatprep.subr.mxu0 0.0
    %526 = vmatpush1.msra.mxu0 0.0
    %527 = vmatprep.subr.mxu0 0.0
    %528 = vmatpush1.msra.mxu0 0.0
    %529 = vmatprep.subr.mxu0 0.0
    %530 = vmatpush1.msra.mxu0 0.0
    %531 = vmatprep.subr.mxu0 0.0
    %532 = vmatpush1.msra.mxu0 0.0
    %533 = vmatprep.subr.mxu0 0.0
    %534 = vmatpush1.msra.mxu0 0.0
    %535 = vmatprep.subr.mxu0 0.0
    %536 = vmatpush1.msra.mxu0 0.0
    %537 = vmatprep.subr.mxu0 0.0
    %538 = vmatpush1.msra.mxu0 0.0
    %539 = vmatprep.subr.mxu0 0.0
    %540 = vmatpush1.msra.mxu0 0.0
    %541 = vmatprep.subr.mxu0 0.0
    %542 = vmatpush1.msra.mxu0 0.0
    %543 = vmatprep.subr.mxu0 0.0
    %544 = vmatpush1.msra.mxu0 0.0
    %545 = vmatprep.subr.mxu0 0.0
    %546 = vmatpush1.msra.mxu0 0.0
    %547 = vmatprep.subr.mxu0 0.0
    %548 = vmatpush1.msra.mxu0 0.0
    %549 = vmatprep.mubr.f32.mxu0 0.0
    %550 = vmatmul.mubr.f32.gmra.mrb[0].mxu0 %v483
    %v551 = vpop.f32.mrb[0].mxu0
    %v552 = vadd.f32 0.0, %v551
    %v553 = vpop.f32.mrb[0].mxu0
    %554 = vdwg.mxu0
    %v556 = vsel %vm481, %v480, 0
    %558 = vmatprep.subr.mxu0 0.0
    %559 = vmatpush1.msra.mxu0 %v325
    %560 = vmatprep.subr.mxu0 0.0
    %561 = vmatpush1.msra.mxu0 0.0
    %562 = vmatprep.subr.mxu0 0.0
    %563 = vmatpush1.msra.mxu0 0.0
    %564 = vmatprep.subr.mxu0 0.0
    %565 = vmatpush1.msra.mxu0 0.0
    %566 = vmatprep.subr.mxu0 0.0
    %567 = vmatpush1.msra.mxu0 0.0
    %568 = vmatprep.subr.mxu0 0.0
    %569 = vmatpush1.msra.mxu0 0.0
    %570 = vmatprep.subr.mxu0 0.0
    %571 = vmatpush1.msra.mxu0 0.0
    %572 = vmatprep.subr.mxu0 0.0
    %573 = vmatpush1.msra.mxu0 0.0
    %574 = vmatprep.subr.mxu0 0.0
    %575 = vmatpush1.msra.mxu0 0.0
    %576 = vmatprep.subr.mxu0 0.0
    %577 = vmatpush1.msra.mxu0 0.0
    %578 = vmatprep.subr.mxu0 0.0
    %579 = vmatpush1.msra.mxu0 0.0
    %580 = vmatprep.subr.mxu0 0.0
    %581 = vmatpush1.msra.mxu0 0.0
    %582 = vmatprep.subr.mxu0 0.0
    %583 = vmatpush1.msra.mxu0 0.0
    %584 = vmatprep.subr.mxu0 0.0
    %585 = vmatpush1.msra.mxu0 0.0
    %586 = vmatprep.subr.mxu0 0.0
    %587 = vmatpush1.msra.mxu0 0.0
    %588 = vmatprep.subr.mxu0 0.0
    %589 = vmatpush1.msra.mxu0 0.0
    %590 = vmatprep.subr.mxu0 0.0
    %591 = vmatpush1.msra.mxu0 0.0
    %592 = vmatprep.subr.mxu0 0.0
    %593 = vmatpush1.msra.mxu0 0.0
    %594 = vmatprep.subr.mxu0 0.0
    %595 = vmatpush1.msra.mxu0 0.0
    %596 = vmatprep.subr.mxu0 0.0
    %597 = vmatpush1.msra.mxu0 0.0
    %598 = vmatprep.subr.mxu0 0.0
    %599 = vmatpush1.msra.mxu0 0.0
    %600 = vmatprep.subr.mxu0 0.0
    %601 = vmatpush1.msra.mxu0 0.0
    %602 = vmatprep.subr.mxu0 0.0
    %603 = vmatpush1.msra.mxu0 0.0
    %604 = vmatprep.subr.mxu0 0.0
    %605 = vmatpush1.msra.mxu0 0.0
    %606 = vmatprep.subr.mxu0 0.0
    %607 = vmatpush1.msra.mxu0 0.0
    %608 = vmatprep.subr.mxu0 0.0
    %609 = vmatpush1.msra.mxu0 0.0
    %610 = vmatprep.subr.mxu0 0.0
    %611 = vmatpush1.msra.mxu0 0.0
    %612 = vmatprep.subr.mxu0 0.0
    %613 = vmatpush1.msra.mxu0 0.0
    %614 = vmatprep.subr.mxu0 0.0
    %615 = vmatpush1.msra.mxu0 0.0
    %616 = vmatprep.subr.mxu0 0.0
    %617 = vmatpush1.msra.mxu0 0.0
    %618 = vmatprep.subr.mxu0 0.0
    %619 = vmatpush1.msra.mxu0 0.0
    %620 = vmatprep.subr.mxu0 0.0
    %621 = vmatpush1.msra.mxu0 0.0
    %622 = vmatprep.mubr.f32.mxu0 0.0
    %623 = vmatmul.mubr.f32.gmra.mrb[0].mxu0 %v556
    %v624 = vpop.f32.mrb[0].mxu0
    %v625 = vadd.f32 0.0, %v624
    %v626 = vpop.f32.mrb[0].mxu0
    %627 = vdwg.mxu0
    %v628 = vsel %vm78, %v552, 0.0
    %629 = vadd.xlane.f32.xlu0 %v628
    %v630 = vpop.xlane.xlu0 %629
    %v631 = vsel %vm78, %v625, 0.0
    %632 = vadd.xlane.f32.xlu0 %v631
    %v633 = vpop.xlane.xlu0 %632
    %v634 = vmul.f32 %v630, %v85
    %v635 = vmul.f32 %v633, %v85
    %v636 = vsub.f32 %v552, %v634
    %v637 = vsub.f32 %v625, %v635
    %v638 = vmul.f32 %v636, %v636
    %v639 = vmul.f32 %v637, %v637
    %v640 = vsel %vm78, %v638, 0.0
    %641 = vadd.xlane.f32.xlu0 %v640
    %v642 = vpop.xlane.xlu0 %641
    %v643 = vsel %vm78, %v639, 0.0
    %644 = vadd.xlane.f32.xlu0 %v643
    %v645 = vpop.xlane.xlu0 %644
    %v646 = vmul.f32 %v642, %v85
    %v647 = vmul.f32 %v645, %v85
    %v648 = vadd.f32 %v646, 1e-05
    %v649 = vadd.f32 %v647, 1e-05
    %v650 = vrsqrt.pop %v648
    %v651 = vrsqrt.pop %v649
    %v652 = vmul.f32 %v636, %v650
    %v653 = vmul.f32 %v637, %v651
    %v655 = vsel %vm78, %v652, 0
    %v658 = vsel %vm78, %v653, 0
    %660 = vmatprep.subr.mxu0 0.0
    %661 = vmatpush1.msra.mxu0 %v114
    %662 = vmatprep.subr.mxu0 0.0
    %663 = vmatpush1.msra.mxu0 %v115
    %664 = vmatprep.subr.mxu0 0.0
    %665 = vmatpush1.msra.mxu0 %v116
    %666 = vmatprep.subr.mxu0 0.0
    %667 = vmatpush1.msra.mxu0 %v117
    %668 = vmatprep.subr.mxu0 0.0
    %669 = vmatpush1.msra.mxu0 0.0
    %670 = vmatprep.subr.mxu0 0.0
    %671 = vmatpush1.msra.mxu0 0.0
    %672 = vmatprep.subr.mxu0 0.0
    %673 = vmatpush1.msra.mxu0 0.0
    %674 = vmatprep.subr.mxu0 0.0
    %675 = vmatpush1.msra.mxu0 0.0
    %676 = vmatprep.subr.mxu0 0.0
    %677 = vmatpush1.msra.mxu0 0.0
    %678 = vmatprep.subr.mxu0 0.0
    %679 = vmatpush1.msra.mxu0 0.0
    %680 = vmatprep.subr.mxu0 0.0
    %681 = vmatpush1.msra.mxu0 0.0
    %682 = vmatprep.subr.mxu0 0.0
    %683 = vmatpush1.msra.mxu0 0.0
    %684 = vmatprep.subr.mxu0 0.0
    %685 = vmatpush1.msra.mxu0 0.0
    %686 = vmatprep.subr.mxu0 0.0
    %687 = vmatpush1.msra.mxu0 0.0
    %688 = vmatprep.subr.mxu0 0.0
    %689 = vmatpush1.msra.mxu0 0.0
    %690 = vmatprep.subr.mxu0 0.0
    %691 = vmatpush1.msra.mxu0 0.0
    %692 = vmatprep.subr.mxu0 0.0
    %693 = vmatpush1.msra.mxu0 0.0
    %694 = vmatprep.subr.mxu0 0.0
    %695 = vmatpush1.msra.mxu0 0.0
    %696 = vmatprep.subr.mxu0 0.0
    %697 = vmatpush1.msra.mxu0 0.0
    %698 = vmatprep.subr.mxu0 0.0
    %699 = vmatpush1.msra.mxu0 0.0
    %700 = vmatprep.subr.mxu0 0.0
    %701 = vmatpush1.msra.mxu0 0.0
    %702 = vmatprep.subr.mxu0 0.0
    %703 = vmatpush1.msra.mxu0 0.0
    %704 = vmatprep.subr.mxu0 0.0
    %705 = vmatpush1.msra.mxu0 0.0
    %706 = vmatprep.subr.mxu0 0.0
    %707 = vmatpush1.msra.mxu0 0.0
    %708 = vmatprep.subr.mxu0 0.0
    %709 = vmatpush1.msra.mxu0 0.0
    %710 = vmatprep.subr.mxu0 0.0
    %711 = vmatpush1.msra.mxu0 0.0
    %712 = vmatprep.subr.mxu0 0.0
    %713 = vmatpush1.msra.mxu0 0.0
    %714 = vmatprep.subr.mxu0 0.0
    %715 = vmatpush1.msra.mxu0 0.0
    %716 = vmatprep.subr.mxu0 0.0
    %717 = vmatpush1.msra.mxu0 0.0
    %718 = vmatprep.subr.mxu0 0.0
    %719 = vmatpush1.msra.mxu0 0.0
    %720 = vmatprep.subr.mxu0 0.0
    %721 = vmatpush1.msra.mxu0 0.0
    %722 = vmatprep.subr.mxu0 0.0
    %723 = vmatpush1.msra.mxu0 0.0
    %724 = vmatprep.mubr.f32.mxu0 0.0
    %725 = vmatmul.mubr.f32.gmra.mrb[0].mxu0 %v655
    %v726 = vpop.f32.mrb[0].mxu0
    %v727 = vadd.f32 0.0, %v726
    %v728 = vpop.f32.mrb[0].mxu0
    %729 = vmatprep.mubr.f32.mxu0 0.0
    %730 = vmatmul.mubr.f32.gmra.mrb[0].mxu0 %v658
    %v731 = vpop.f32.mrb[0].mxu0
    %v732 = vadd.f32 0.0, %v731
    %v733 = vpop.f32.mrb[0].mxu0
    %734 = vdwg.mxu0
    %v735 = vadd.f32 %v76, %v727
    %v736 = vadd.f32 %v77, %v732
    %737 = vst.msk [vmem:[#allocation10] sm:$0xff] %vm78, %v735
    %738 = vst.msk [vmem:[#allocation10 + $0x8] sm:$0xff] %vm78, %v736
    // Predicated region
    $region38: #{tpu_custom_call.1} parent=1 // pred_check
      _
    $region39: #{tpu_custom_call.1} parent=1 // pred_check_branch
      %740 = sbr.rel (0) target = $region41
    $region40: #{tpu_custom_call.1} parent=1 // pred_region
      %s742 = ssub.s32 256, 256
      %743 = vsyncadd [#allocation4], %s742
      %s744 = sshll.u32 [#allocation10], 4
      %s745 = int_to_ptr.vmem [resolvable:$true] %s744
      %750 = dma.vmem_to_hbm [thread:$0]  %s745, 256, %s5, [#allocation4], 128, 128, 8
    $region41: #{tpu_custom_call.1} parent=1 // pred_fallthru
      _
    // Predicated region
    $region42: #{tpu_custom_call.1} parent=1 // pred_check
      _
    $region43: #{tpu_custom_call.1} parent=1 // pred_check_branch
      %752 = sbr.rel (0) target = $region45
    $region44: #{tpu_custom_call.1} parent=1 // pred_region
      %753 = dma.done [#allocation4], 256
    $region45: #{tpu_custom_call.1} parent=1 // pred_fallthru
      _
    %754 = vsyncpa [#allocation3], 1
    %755 = vsyncpa [#allocation6], 1
    %756 = vsyncpa [#allocation9], 1
    %757 = vsyncpa [#allocation4], 1

</llo_original>
